<compile_context>
chip_gen: v5e
topology: v5e:2x2
jax: 0.10.0
libtpu: 0.0.40
codegen_flags: <defaults>
</compile_context>

<pallas_src>
import jax
import jax.numpy as jnp
from jax.experimental import pallas as pl
from jax.experimental.pallas import tpu as pltpu


def _round_up(x: int, m: int) -> int:
    return (x + m - 1) // m * m


def _ce_kernel(logits_ref, labels_ref, loss_ref, m_ref, l_ref, p_ref):
    """grid = (row_tile i [parallel], class_tile j [arbitrary])."""
    j = pl.program_id(1)
    last_j = pl.num_programs(1) - 1

    @pl.when(j == 0)
    def _():
        m_ref[...] = jnp.full_like(m_ref, -jnp.inf)
        l_ref[...] = jnp.zeros_like(l_ref)
        p_ref[...] = jnp.zeros_like(p_ref)

    x = logits_ref[...].astype(jnp.float32)          # [TN, TC], up-cast in VMEM
    labels = labels_ref[...]                          # [TN, 1] int32
    tn, tc = x.shape

    # ---- online (flash-style) logsumexp over the class axis ----
    tile_max = jnp.max(x, axis=-1, keepdims=True)                     # [TN, 1]
    m_new = jnp.maximum(m_ref[...], tile_max)
    alpha = jnp.exp(m_ref[...] - m_new)                               # rescale old sum
    l_ref[...] = alpha * l_ref[...] + jnp.sum(jnp.exp(x - m_new), axis=-1, keepdims=True)
    m_ref[...] = m_new

    # ---- masked select of the label's logit inside this class tile ----
    col_ids = j * tc + jax.lax.broadcasted_iota(jnp.int32, (tn, tc), 1)
    hit = col_ids == labels                                           # [TN, TC] bool
    p_ref[...] += jnp.sum(jnp.where(hit, x, 0.0), axis=-1, keepdims=True)

    # ---- finalize: per-row loss, masked for ignored/padded rows, emit tile partial sum ----
    @pl.when(j == last_j)
    def _():
        valid = labels >= 0                                           # ignore_index (-100) + padding
        lse = jnp.log(l_ref[...]) + m_ref[...]                        # [TN, 1]
        per_row = jnp.where(valid, lse - p_ref[...], 0.0)
        loss_sum = jnp.sum(per_row)
        loss_ref[...] = jnp.broadcast_to(loss_sum, loss_ref.shape).astype(jnp.float32)


def ce_loss(output, label, index=None, *, tile_n=512, tile_c=2048):
    """Mirrors CELoss.forward: returns (mean cross-entropy, batch_size)."""
    del index  # unused by the reference module
    n, c = output.shape

    # tile sizes respecting (8, 128) layout; pad arrays to exact tile multiples
    n_pad = _round_up(n, 8)
    c_pad = _round_up(c, 128)
    tn = min(_round_up(tile_n, 8), n_pad)
    tc = min(_round_up(tile_c, 128), c_pad)
    n_pad = _round_up(n_pad, tn)
    c_pad = _round_up(c_pad, tc)
    grid = (n_pad // tn, c_pad // tc)

    big_neg = float(jnp.finfo(output.dtype).min) / 2.0 \
        if jnp.issubdtype(output.dtype, jnp.floating) else -1e30

    logits = output  # native dtype; up-cast happens inside the kernel
    if n_pad != n:
        logits = jnp.pad(logits, ((0, n_pad - n), (0, 0)))
    if c_pad != c:
        logits = jnp.pad(logits, ((0, 0), (0, c_pad - c)), constant_values=big_neg)

    labels = label.astype(jnp.int32)
    if n_pad != n:
        labels = jnp.pad(labels, ((0, n_pad - n),), constant_values=-100)
    labels2d = labels.reshape(n_pad, 1)

    itemsize = jnp.dtype(output.dtype).itemsize
    cost = pl.CostEstimate(
        flops=5 * n * c,
        transcendentals=n * c,
        bytes_accessed=n_pad * c_pad * itemsize + n_pad * 4 + grid[0] * 128 * 4,
    )

    loss_parts = pl.pallas_call(
        _ce_kernel,
        out_shape=jax.ShapeDtypeStruct((grid[0], 1, 128), jnp.float32),
        grid_spec=pltpu.PrefetchScalarGridSpec(
            num_scalar_prefetch=0,
            grid=grid,
            in_specs=[
                pl.BlockSpec((tn, tc), lambda i, j: (i, j)),
                pl.BlockSpec((tn, 1), lambda i, j: (i, 0)),
            ],
            out_specs=pl.BlockSpec((1, 1, 128), lambda i, j: (i, 0, 0)),
            scratch_shapes=[
                pltpu.VMEM((tn, 1), jnp.float32),   # running max
                pltpu.VMEM((tn, 1), jnp.float32),   # running sum-exp
                pltpu.VMEM((tn, 1), jnp.float32),   # running picked logit
            ],
        ),
        compiler_params=pltpu.CompilerParams(
            dimension_semantics=("parallel", "arbitrary"),
        ),
        cost_estimate=cost,
    )(logits, labels2d)

    total = jnp.sum(loss_parts[:, 0, 0])
    num_valid = jnp.sum((label >= 0).astype(jnp.float32))
    mean = total / jnp.maximum(num_valid, 1.0)
    return mean, label.shape[0]


if __name__ == "__main__":
    key = jax.random.PRNGKey(0)
    k_logits, k_labels, k2_logits, k2_labels = jax.random.split(key, 4)

    # --- small shapes matching the module (batch=8, classes=32), single tile ---
    N, C = 8, 32
    logits = jax.random.normal(k_logits, (N, C), dtype=jnp.float32)
    labels = jax.random.randint(k_labels, (N,), 0, C, dtype=jnp.int32)
    index = jnp.arange(N, dtype=jnp.int32)  # unused, kept for signature parity

    loss, batch = ce_loss(logits, labels, index)
    loss = jax.block_until_ready(loss)

    ref = jnp.mean(
        jax.nn.logsumexp(logits, axis=-1)
        - jnp.take_along_axis(logits, labels[:, None], axis=-1)[:, 0]
    )
    assert batch == N
    assert jnp.allclose(loss, ref, rtol=1e-5, atol=1e-5), (loss, ref)

    # --- multi-tile path (row + class tiling, padding, ignore_index) ---
    N2, C2 = 64, 300
    logits2 = jax.random.normal(k2_logits, (N2, C2), dtype=jnp.float32)
    labels2 = jax.random.randint(k2_labels, (N2,), 0, C2, dtype=jnp.int32)
    labels2 = labels2.at[3].set(-100)  # PyTorch default ignore_index
    loss2, batch2 = ce_loss(logits2, labels2, None, tile_n=16, tile_c=128)
    loss2 = jax.block_until_ready(loss2)

    valid2 = labels2 >= 0
    lse2 = jax.nn.logsumexp(logits2, axis=-1)
    picked2 = jnp.take_along_axis(
        logits2, jnp.clip(labels2, 0, C2 - 1)[:, None], axis=-1)[:, 0]
    ref2 = jnp.sum(jnp.where(valid2, lse2 - picked2, 0.0)) / jnp.sum(valid2)
    assert batch2 == N2
    assert jnp.allclose(loss2, ref2, rtol=1e-5, atol=1e-5), (loss2, ref2)

    print("KERNEL_OK")
</pallas_src>

<mosaic_0001>
module attributes {stable_mosaic.version = 11 : i64} {
  func.func @_ce_kernel(%arg0: i32, %arg1: i32, %arg2: memref<8x128xf32, #tpu.memory_space<vmem>>, %arg3: memref<8x1xi32, #tpu.memory_space<vmem>>, %arg4: memref<1x1x128xf32, #tpu.memory_space<vmem>>, %arg5: memref<8x1xf32, #tpu.memory_space<vmem>>, %arg6: memref<8x1xf32, #tpu.memory_space<vmem>>, %arg7: memref<8x1xf32, #tpu.memory_space<vmem>>) attributes {dimension_semantics = [#tpu.dimension_semantics<parallel>, #tpu.dimension_semantics<arbitrary>], iteration_bounds = array<i64: 1, 1>, scalar_prefetch = 0 : i64, scratch_operands = 3 : i64, tpu.core_type = #tpu.core_type<tc>, window_params = [{transform_indices = @transform_0, window_bounds = array<i64: 8, 128>}, {transform_indices = @transform_1, window_bounds = array<i64: 8, 1>}, {transform_indices = @transform_2, window_bounds = array<i64: 1, 1, 128>}]} {
    %c0_i32 = arith.constant 0 : i32
    %0 = arith.cmpi eq, %arg1, %c0_i32 : i32
    %1 = arith.extui %0 : i1 to i32
    %c0_i32_0 = arith.constant 0 : i32
    %2 = arith.cmpi ne, %1, %c0_i32_0 : i32
    scf.if %2 {
      %cst_23 = arith.constant 0xFF800000 : f32
      %38 = vector.broadcast %cst_23 : f32 to vector<8x1xf32>
      %c0_24 = arith.constant 0 : index
      %c0_25 = arith.constant 0 : index
      %39 = vector.load %arg5[%c0_24, %c0_25] : memref<8x1xf32, #tpu.memory_space<vmem>>, vector<8x1xf32>
      tpu.vector_store %arg5[%c0_24, %c0_25], %38 {strides = array<i32>} : memref<8x1xf32, #tpu.memory_space<vmem>>, vector<8x1xf32>,
      %cst_26 = arith.constant 0.000000e+00 : f32
      %40 = vector.broadcast %cst_26 : f32 to vector<8x1xf32>
      %c0_27 = arith.constant 0 : index
      %c0_28 = arith.constant 0 : index
      %41 = vector.load %arg6[%c0_27, %c0_28] : memref<8x1xf32, #tpu.memory_space<vmem>>, vector<8x1xf32>
      tpu.vector_store %arg6[%c0_27, %c0_28], %40 {strides = array<i32>} : memref<8x1xf32, #tpu.memory_space<vmem>>, vector<8x1xf32>,
      %cst_29 = arith.constant 0.000000e+00 : f32
      %42 = vector.broadcast %cst_29 : f32 to vector<8x1xf32>
      %c0_30 = arith.constant 0 : index
      %c0_31 = arith.constant 0 : index
      %43 = vector.load %arg7[%c0_30, %c0_31] : memref<8x1xf32, #tpu.memory_space<vmem>>, vector<8x1xf32>
      tpu.vector_store %arg7[%c0_30, %c0_31], %42 {strides = array<i32>} : memref<8x1xf32, #tpu.memory_space<vmem>>, vector<8x1xf32>,
    } else {
    }
    %c0 = arith.constant 0 : index
    %c0_1 = arith.constant 0 : index
    %3 = vector.load %arg2[%c0, %c0_1] : memref<8x128xf32, #tpu.memory_space<vmem>>, vector<8x128xf32>
    %c0_2 = arith.constant 0 : index
    %c0_3 = arith.constant 0 : index
    %4 = vector.load %arg3[%c0_2, %c0_3] : memref<8x1xi32, #tpu.memory_space<vmem>>, vector<8x1xi32>
    %cst = arith.constant dense<0xFF800000> : vector<8xf32>
    %5 = vector.multi_reduction <maximumf>, %3, %cst [1] : vector<8x128xf32> to vector<8xf32>
    %6 = vector.shape_cast %5 : vector<8xf32> to vector<8x1xf32>
    %c0_4 = arith.constant 0 : index
    %c0_5 = arith.constant 0 : index
    %7 = vector.load %arg5[%c0_4, %c0_5] : memref<8x1xf32, #tpu.memory_space<vmem>>, vector<8x1xf32>
    %8 = arith.maximumf %7, %6 : vector<8x1xf32>
    %c0_6 = arith.constant 0 : index
    %c0_7 = arith.constant 0 : index
    %9 = vector.load %arg5[%c0_6, %c0_7] : memref<8x1xf32, #tpu.memory_space<vmem>>, vector<8x1xf32>
    %10 = arith.subf %9, %8 : vector<8x1xf32>
    %11 = math.exp %10 : vector<8x1xf32>
    %c0_8 = arith.constant 0 : index
    %c0_9 = arith.constant 0 : index
    %12 = vector.load %arg6[%c0_8, %c0_9] : memref<8x1xf32, #tpu.memory_space<vmem>>, vector<8x1xf32>
    %13 = arith.mulf %11, %12 : vector<8x1xf32>
    %14 = vector.broadcast %8 : vector<8x1xf32> to vector<8x128xf32>
    %15 = arith.subf %3, %14 : vector<8x128xf32>
    %16 = math.exp %15 : vector<8x128xf32>
    %cst_10 = arith.constant dense<0.000000e+00> : vector<8xf32>
    %17 = vector.multi_reduction <add>, %16, %cst_10 [1] : vector<8x128xf32> to vector<8xf32>
    %18 = vector.shape_cast %17 : vector<8xf32> to vector<8x1xf32>
    %19 = arith.addf %13, %18 : vector<8x1xf32>
    %c0_11 = arith.constant 0 : index
    %c0_12 = arith.constant 0 : index
    %20 = vector.load %arg6[%c0_11, %c0_12] : memref<8x1xf32, #tpu.memory_space<vmem>>, vector<8x1xf32>
    tpu.vector_store %arg6[%c0_11, %c0_12], %19 {strides = array<i32>} : memref<8x1xf32, #tpu.memory_space<vmem>>, vector<8x1xf32>,
    %c0_13 = arith.constant 0 : index
    %c0_14 = arith.constant 0 : index
    %21 = vector.load %arg5[%c0_13, %c0_14] : memref<8x1xf32, #tpu.memory_space<vmem>>, vector<8x1xf32>
    tpu.vector_store %arg5[%c0_13, %c0_14], %8 {strides = array<i32>} : memref<8x1xf32, #tpu.memory_space<vmem>>, vector<8x1xf32>,
    %c128_i32 = arith.constant 128 : i32
    %22 = arith.muli %arg1, %c128_i32 : i32
    %23 = tpu.iota {dimensions = array<i32: 1>} : vector<8x128xi32>
    %24 = vector.broadcast %22 : i32 to vector<8x128xi32>
    %25 = arith.addi %24, %23 : vector<8x128xi32>
    %26 = vector.broadcast %4 : vector<8x1xi32> to vector<8x128xi32>
    %27 = arith.cmpi eq, %25, %26 : vector<8x128xi32>
    %c0_15 = arith.constant 0 : index
    %c0_16 = arith.constant 0 : index
    %28 = vector.load %arg7[%c0_15, %c0_16] : memref<8x1xf32, #tpu.memory_space<vmem>>, vector<8x1xf32>
    %cst_17 = arith.constant 0.000000e+00 : f32
    %29 = vector.broadcast %cst_17 : f32 to vector<8x128xf32>
    %30 = arith.select %27, %3, %29 : vector<8x128xi1>, vector<8x128xf32>
    %cst_18 = arith.constant dense<0.000000e+00> : vector<8xf32>
    %31 = vector.multi_reduction <add>, %30, %cst_18 [1] : vector<8x128xf32> to vector<8xf32>
    %32 = vector.shape_cast %31 : vector<8xf32> to vector<8x1xf32>
    %33 = arith.addf %28, %32 : vector<8x1xf32>
    %c0_19 = arith.constant 0 : index
    %c0_20 = arith.constant 0 : index
    %34 = vector.load %arg7[%c0_19, %c0_20] : memref<8x1xf32, #tpu.memory_space<vmem>>, vector<8x1xf32>
    tpu.vector_store %arg7[%c0_19, %c0_20], %33 {strides = array<i32>} : memref<8x1xf32, #tpu.memory_space<vmem>>, vector<8x1xf32>,
    %c0_i32_21 = arith.constant 0 : i32
    %35 = arith.cmpi eq, %arg1, %c0_i32_21 : i32
    %36 = arith.extui %35 : i1 to i32
    %c0_i32_22 = arith.constant 0 : i32
    %37 = arith.cmpi ne, %36, %c0_i32_22 : i32
    scf.if %37 {
      %c0_i32_23 = arith.constant 0 : i32
      %38 = vector.broadcast %c0_i32_23 : i32 to vector<8x1xi32>
      %39 = arith.cmpi sge, %4, %38 : vector<8x1xi32>
      %c0_24 = arith.constant 0 : index
      %c0_25 = arith.constant 0 : index
      %40 = vector.load %arg6[%c0_24, %c0_25] : memref<8x1xf32, #tpu.memory_space<vmem>>, vector<8x1xf32>
      %41 = math.log %40 : vector<8x1xf32>
      %c0_26 = arith.constant 0 : index
      %c0_27 = arith.constant 0 : index
      %42 = vector.load %arg5[%c0_26, %c0_27] : memref<8x1xf32, #tpu.memory_space<vmem>>, vector<8x1xf32>
      %43 = arith.addf %41, %42 : vector<8x1xf32>
      %c0_28 = arith.constant 0 : index
      %c0_29 = arith.constant 0 : index
      %44 = vector.load %arg7[%c0_28, %c0_29] : memref<8x1xf32, #tpu.memory_space<vmem>>, vector<8x1xf32>
      %45 = arith.subf %43, %44 : vector<8x1xf32>
      %cst_30 = arith.constant 0.000000e+00 : f32
      %46 = vector.broadcast %cst_30 : f32 to vector<8x1xf32>
      %47 = arith.select %39, %45, %46 : vector<8x1xi1>, vector<8x1xf32>
      %48 = vector.shape_cast %47 : vector<8x1xf32> to vector<1x8x1xf32>
      %cst_31 = arith.constant dense<0.000000e+00> : vector<1xf32>
      %49 = vector.multi_reduction <add>, %48, %cst_31 [1, 2] : vector<1x8x1xf32> to vector<1xf32>
      %50 = vector.shape_cast %49 : vector<1xf32> to vector<1x1x1xf32>
      %51 = vector.extract %50[0, 0, 0] : f32 from vector<1x1x1xf32>
      %52 = vector.broadcast %51 : f32 to vector<1x1x128xf32>
      %c0_32 = arith.constant 0 : index
      %c0_33 = arith.constant 0 : index
      %c0_34 = arith.constant 0 : index
      %53 = vector.load %arg4[%c0_32, %c0_33, %c0_34] : memref<1x1x128xf32, #tpu.memory_space<vmem>>, vector<1x1x128xf32>
      tpu.vector_store %arg4[%c0_32, %c0_33, %c0_34], %52 {strides = array<i32>} : memref<1x1x128xf32, #tpu.memory_space<vmem>>, vector<1x1x128xf32>,
    } else {
    }
    return
  }
  func.func @transform_0(%arg0: i32, %arg1: i32) -> (i32, i32) {
    %c0_i32 = arith.constant 0 : i32
    return %arg0, %arg1 : i32, i32
  }
  func.func @transform_1(%arg0: i32, %arg1: i32) -> (i32, i32) {
    %c0_i32 = arith.constant 0 : i32
    %c0_i32_0 = arith.constant 0 : i32
    return %arg0, %c0_i32 : i32, i32
  }
  func.func @transform_2(%arg0: i32, %arg1: i32) -> (i32, i32, i32) {
    %c0_i32 = arith.constant 0 : i32
    %c0_i32_0 = arith.constant 0 : i32
    %c0_i32_1 = arith.constant 0 : i32
    return %arg0, %c0_i32, %c0_i32_0 : i32, i32, i32
  }
}

</mosaic_0001>

<llo_original>
// kernel: tpu_custom_call.1
$region0: #{tpu_custom_call.1}
  #allocation0 [shape = 'u32[]', space=smem, size = 0x4, offset = 0x4, fixed_abs, tag = 'smem constant byte address 0x4 - core index']
  #allocation1 [shape = 'u32[72,128]{1,0:T(1,128)}', space=vmem, size = 0x9000, scoped, tag = 'internal scratch']
  #allocation2 [shape = 'f32[8,1]{1,0:T(8,128)}', space=vmem, size = 0x1000, scoped, tag = 'scratch operand']
  #allocation3 [shape = 'f32[8,1]{1,0:T(8,128)}', space=vmem, size = 0x1000, scoped, tag = 'scratch operand']
  #allocation4 [shape = 'f32[8,1]{1,0:T(8,128)}', space=vmem, size = 0x1000, scoped, tag = 'scratch operand']
  %s0 = inlined_call_operand.vmem [shape: f32[8,128], index: 0, kind: input, shape index: {}]
  %s1 = inlined_call_operand.vmem [shape: s32[8,1], index: 1, kind: input, shape index: {}]
  %s2 = inlined_call_operand.hbm [shape: f32[1,1,128], index: 2, kind: output, shape index: {}]
  %s3 = sld [smem:[#allocation0]]
  $region26: #{tpu_custom_call.1} parent=0
    _
  %s5 = ssub.s32 1, %s3
  %s6 = scalar_select 0, %s5, %s3
  $region1: #{tpu_custom_call.1} parent=0
    #allocation5 [shape = 'u8[512]{0}', space=vmem, size = 0x400, scoped, tag = 'output window, operand 0, single buffered']
    #allocation6 [shape = 's32[1]{0}', space=sflag, size = 0x4, scoped, tag = 'scoped memory for tpu_custom_call.1']
    %7 = vsyncpa [#allocation6], 0
    // Predicated region
    $region2: #{tpu_custom_call.1} parent=1 // pred_check
      _
    $region3: #{tpu_custom_call.1} parent=1 // pred_check_branch
      %9 = sbr.rel (0) target = $region5
    $region4: #{tpu_custom_call.1} parent=1 // pred_region
      _
    $region5: #{tpu_custom_call.1} parent=1 // pred_fallthru
      _
    // Predicated region
    $region6: #{tpu_custom_call.1} parent=1 // pred_check
      _
    $region7: #{tpu_custom_call.1} parent=1 // pred_check_branch
      %11 = sbr.rel (0) target = $region9
    $region8: #{tpu_custom_call.1} parent=1 // pred_region
      _
    $region9: #{tpu_custom_call.1} parent=1 // pred_fallthru
      _
    %p12 = scmp.eq.s32.totalorder 0, 0
    // Predicated region
    $region10: #{tpu_custom_call.1} parent=1 // pred_check
      %p13 = pneg %p12
    $region11: #{tpu_custom_call.1} parent=1 // pred_check_branch
      %15 = sbr.rel (%p13) target = $region13
    $region12: #{tpu_custom_call.1} parent=1 // pred_region
      %vm16 = vcmask 7168
      %17 = vst.msk [vmem:[#allocation2] sm:$0xff] %vm16, -inf
      %18 = vst.msk [vmem:[#allocation3] sm:$0xff] %vm16, 0.0
      %19 = vst.msk [vmem:[#allocation4] sm:$0xff] %vm16, 0.0
    $region13: #{tpu_custom_call.1} parent=1 // pred_fallthru
      _
    %v20 = vld [vmem:[%s0] sm:$0xff]
    %v21 = vld [vmem:[%s1] sm:$0xff]
    %22 = vmax.xlane.f32.xlu0 %v20
    %v23 = vpop.xlane.xlu0 %22
    %v24 = vld [vmem:[#allocation2] sm:$0xff]
    %v25 = vmax.f32 %v24, %v23
    %v26 = vsub.f32 %v24, %v25
    %v27 = vmul.f32 %v26, 1.442695
    %v28 = vpow.pop %v27
    %v29 = vld [vmem:[#allocation3] sm:$0xff]
    %v30 = vmul.f32 %v28, %v29
    %32 = vset.pattern.permute.xlu0 0
    %33 = vperm.xlu0 %32, %v25
    %v34 = vpop.permute.xlu0 %33
    %v36 = vsub.f32 %v20, %v34
    %v37 = vmul.f32 %v36, 1.442695
    %v38 = vpow.pop %v37
    %39 = vadd.xlane.f32.xlu0 %v38
    %v40 = vpop.xlane.xlu0 %39
    %v41 = vadd.f32 %v30, %v40
    %vm42 = vcmask 7168
    %43 = vst.msk [vmem:[#allocation3] sm:$0xff] %vm42, %v41
    %44 = vst.msk [vmem:[#allocation2] sm:$0xff] %vm42, %v25
    %s45 = smul.u32 0, 128
    %v46 = vlaneseq
    %v47 = vand.u32 %v46, 127
    %v48 = vstv %s45
    %v49 = vadd.s32 %v48, %v47
    %50 = vset.pattern.permute.xlu0 0
    %51 = vperm.xlu0 %50, %v21
    %v52 = vpop.permute.xlu0 %51
    %vm53 = vcmp.eq.s32.totalorder %v49, %v52
    %v54 = vld [vmem:[#allocation4] sm:$0xff]
    %v55 = vsel %vm53, %v20, 0.0
    %56 = vadd.xlane.f32.xlu0 %v55
    %v57 = vpop.xlane.xlu0 %56
    %v58 = vadd.f32 %v54, %v57
    %59 = vst.msk [vmem:[#allocation4] sm:$0xff] %vm42, %v58
    // Predicated region
    $region14: #{tpu_custom_call.1} parent=1 // pred_check
      %p60 = pneg %p12
    $region15: #{tpu_custom_call.1} parent=1 // pred_check_branch
      %62 = sbr.rel (%p60) target = $region17
    $region16: #{tpu_custom_call.1} parent=1 // pred_region
      %vm63 = vcmp.ge.s32.totalorder %v21, 0
      %v64 = vld [vmem:[#allocation3] sm:$0xff]
      %v65 = vlog2.pop %v64
      %v66 = vmul.f32 %v65, 0.6931472
      %v67 = vld [vmem:[#allocation2] sm:$0xff]
      %v68 = vadd.f32 %v66, %v67
      %v69 = vld [vmem:[#allocation4] sm:$0xff]
      %v70 = vsub.f32 %v68, %v69
      %v71 = vsel %vm63, %v70, 0.0
      %v72 = vsel %vm42, %v71, 0.0
      %73 = vadd.xlane.f32.xlu0 %v72
      %v74 = vpop.xlane.xlu0 %73
      %v75 = vrot.slane %v74, 4
      %v76 = vadd.f32 %v74, %v75
      %v77 = vrot.slane %v76, 2
      %v78 = vadd.f32 %v76, %v77
      %v79 = vrot.slane %v78, 1
      %v80 = vadd.f32 %v78, %v79
      %s81 = vtos %v80
      %v82 = vstv %s81
      %83 = vst [vmem:[#allocation5] sm:$0x1] %v82
    $region17: #{tpu_custom_call.1} parent=1 // pred_fallthru
      _
    // Predicated region
    $region18: #{tpu_custom_call.1} parent=1 // pred_check
      _
    $region19: #{tpu_custom_call.1} parent=1 // pred_check_branch
      %85 = sbr.rel (0) target = $region21
    $region20: #{tpu_custom_call.1} parent=1 // pred_region
      %87 = vsyncadd [#allocation6], 0
      %s89 = sshll.u32 [#allocation5], 4
      %s90 = int_to_ptr.vmem [resolvable:$true] %s89
      %s91 = sshll.u32 %s2, 4
      %s92 = int_to_ptr.hbm [resolvable:$true] %s91
      %94 = dma.vmem_to_hbm [thread:$0]  %s90, 16, %s92, [#allocation6]
    $region21: #{tpu_custom_call.1} parent=1 // pred_fallthru
      _
    // Predicated region
    $region22: #{tpu_custom_call.1} parent=1 // pred_check
      _
    $region23: #{tpu_custom_call.1} parent=1 // pred_check_branch
      %96 = sbr.rel (0) target = $region25
    $region24: #{tpu_custom_call.1} parent=1 // pred_region
      %98 = dma.done [#allocation6], 16
    $region25: #{tpu_custom_call.1} parent=1 // pred_fallthru
      _
    %99 = vsyncpa [#allocation6], 1

</llo_original>
